<compile_context>
chip_gen: v5e
topology: v5e:2x2
jax: 0.10.0
libtpu: 0.0.40
codegen_flags: <defaults>
</compile_context>

<pallas_src>
import functools

import jax
import jax.numpy as jnp
from jax import lax
from jax.experimental import pallas as pl
from jax.experimental.pallas import tpu as pltpu

EPS = 1e-5  # torch.nn.LayerNorm default


def _gelu_tanh(x):
    # nn.GELU, tanh approximation (EUP tanh — a free slot under the DMA
    # bottleneck).  Differs from the exact-erf form by < ~1e-3 abs.
    c = 0.7978845608028654  # sqrt(2/pi)
    return 0.5 * x * (1.0 + jnp.tanh(c * (x + 0.044715 * x * x * x)))


def _layernorm_nchw_kernel(x_ref, gamma_ref, beta_ref, o_ref, *, fuse_gelu):
    # x_ref: (Bt, C, T) -- C on sublanes (reduction axis), spatial tile T on
    # lanes.  gamma_ref / beta_ref: (1, C, 1), broadcast along batch & lanes.
    x = x_ref[...].astype(jnp.float32)                    # (Bt, C, T)
    inv_c = 1.0 / x.shape[1]
    # Two-pass (centered) statistics over the channel axis.  Matches
    # torch.nn.LayerNorm numerics; both passes only touch VMEM, so the extra
    # VPU work is hidden under the HBM DMA.
    mean = jnp.sum(x, axis=1, keepdims=True) * inv_c       # (Bt, 1, T)
    xc = x - mean
    var = jnp.sum(xc * xc, axis=1, keepdims=True) * inv_c  # (Bt, 1, T)
    inv = lax.rsqrt(var + EPS)                             # EUP rsqrt
    g = gamma_ref[...].astype(jnp.float32)                 # (1, C, 1)
    b = beta_ref[...].astype(jnp.float32)                  # (1, C, 1)
    y = xc * inv * g + b
    if fuse_gelu:
        # DAttention.conv_offset applies nn.GELU() right after LayerNormProxy;
        # fusing it here halves HBM traffic for this segment.
        y = _gelu_tanh(y)
    # NOTE: on ragged trailing spatial (or batch) tiles the padded lanes/rows
    # hold garbage.  Every output element depends only on its own (batch,
    # lane) column — stats never cross lanes or batch entries — and Pallas
    # masks padded regions on writeback, so valid outputs are never
    # contaminated.  Keep future refactors free of cross-lane reductions.
    o_ref[...] = y.astype(o_ref.dtype)


def _round_up(x, m):
    return -(-x // m) * m


def _vmem_need_bytes(bt, c, tile_hw, dtype):
    """Per-step VMEM footprint using the *padded* layout.

    Counts: input + output, each double-buffered (4 copies at `itemsize`),
    plus ~2 full-tile f32 temporaries (the upcast and the normalized value)
    — the latter dominates for bf16/fp8 inputs.
    """
    itemsize = jnp.dtype(dtype).itemsize
    sublane = 8 * max(1, 4 // itemsize)        # 8 (f32) / 16 (bf16) / 32 (int8)
    c_pad = _round_up(c, sublane)
    cols = _round_up(tile_hw, 128)
    eff_bytes_per_elem = 4 * itemsize + 2 * 4
    return bt * c_pad * cols * eff_bytes_per_elem


def _default_budget_bytes():
    """Total per-step VMEM budget (all buffers + temporaries).

    24 MiB corresponds to ~4 MiB per double-buffered f32 I/O copy — already on
    the flat part of the measured bandwidth curve on v5e/v6e.  On v7x (64 MiB
    VMEM/TC but ~3.2 TB/s HBM) the fixed ~0.35 us/step overhead is relatively
    larger, so bump the budget; the resulting footprint (< ~44 MiB incl.
    headroom) still fits v7x's 64 MiB.
    """
    budget = 24 * 1024 * 1024
    try:
        info = pltpu.get_tpu_info()
        if info.vmem_capacity_bytes <= 96 * 1024 * 1024:  # v7x-class VMEM
            budget = 36 * 1024 * 1024
    except Exception:
        pass
    return budget


def _choose_block(B, C, HW, dtype, budget_bytes):
    """Pick (Bt, tile_hw): lane-dense spatial tile + batch aggregation."""
    # 1) Spatial tile: largest multiple of 128 lanes within budget, or the
    #    full extent (a full-extent last dim is always a legal block shape).
    one_col = _vmem_need_bytes(1, C, 128, dtype) // 128   # bytes per lane-column
    max_cols = max(128, (budget_bytes // max(1, one_col)) // 128 * 128)
    tile_hw = int(HW) if HW <= max_cols else int(max_cols)

    # 2) Batch aggregation: move several batch elements per step so each step
    #    transfers ~budget bytes even when the per-batch slab is tiny.
    per_batch = _vmem_need_bytes(1, C, tile_hw, dtype)
    bt = int(max(1, min(B, budget_bytes // max(1, per_batch))))

    # 3) Megacore: keep the grid at >= 4 steps when the problem allows, so
    #    both v7x TensorCores get work under ("parallel", "parallel").
    def n_steps(bt_, t_):
        return (-(-B // bt_)) * (-(-HW // t_))

    while bt > 1 and n_steps(bt, tile_hw) < 4:
        bt = max(1, bt // 2)
    while tile_hw > 128 and n_steps(bt, tile_hw) < 4:
        tile_hw = max(128, _round_up(tile_hw // 2, 128))

    return bt, tile_hw


def layer_norm_proxy(x, gamma, beta, *, fuse_gelu=False, block=None,
                     budget_bytes=None):
    """LayerNormProxy forward.  x: (B, C, H, W); gamma, beta: (C,).

    Returns (B, C, H, W).  With fuse_gelu=True, applies the GELU that follows
    LayerNormProxy inside DAttention.conv_offset as a fused epilogue.
    """
    B, C, H, W = x.shape
    HW = H * W
    x3 = x.reshape(B, C, HW)          # free reshape: NCHW is already row-major
    gamma3 = gamma.reshape(1, C, 1)
    beta3 = beta.reshape(1, C, 1)

    if budget_bytes is None:
        budget_bytes = _default_budget_bytes()
    if block is None:
        bt, tile_hw = _choose_block(B, C, HW, x.dtype, budget_bytes)
    else:
        bt, tile_hw = block
        bt = int(min(bt, B))
        tile_hw = int(min(tile_hw, HW))

    vmem_need = _vmem_need_bytes(bt, C, tile_hw, x.dtype)
    vmem_limit = int(min(max(32 * 1024 * 1024, vmem_need + 8 * 1024 * 1024),
                         64 * 1024 * 1024))

    grid = (pl.cdiv(B, bt), pl.cdiv(HW, tile_hw))
    kernel = functools.partial(_layernorm_nchw_kernel, fuse_gelu=fuse_gelu)

    out3 = pl.pallas_call(
        kernel,
        out_shape=jax.ShapeDtypeStruct((B, C, HW), x.dtype),
        grid=grid,
        in_specs=[
            pl.BlockSpec((bt, C, tile_hw), lambda b, t: (b, 0, t)),
            pl.BlockSpec((1, C, 1), lambda b, t: (0, 0, 0)),
            pl.BlockSpec((1, C, 1), lambda b, t: (0, 0, 0)),
        ],
        out_specs=pl.BlockSpec((bt, C, tile_hw), lambda b, t: (b, 0, t)),
        compiler_params=pltpu.CompilerParams(
            dimension_semantics=("parallel", "parallel"),
            vmem_limit_bytes=vmem_limit,
        ),
    )(x3, gamma3, beta3)

    return out3.reshape(B, C, H, W)


def _reference(x, gamma, beta, *, fuse_gelu=False):
    # Pure-JAX reference of the PyTorch LayerNormProxy forward (+ optional GELU).
    xt = jnp.transpose(x, (0, 2, 3, 1)).astype(jnp.float32)
    mean = jnp.mean(xt, axis=-1, keepdims=True)
    var = jnp.mean((xt - mean) ** 2, axis=-1, keepdims=True)
    y = (xt - mean) / jnp.sqrt(var + EPS) * gamma.astype(jnp.float32) \
        + beta.astype(jnp.float32)
    if fuse_gelu:
        y = _gelu_tanh(y)
    return jnp.transpose(y, (0, 3, 1, 2)).astype(x.dtype)


if __name__ == "__main__":
    key = jax.random.PRNGKey(0)
    kx, kg, kb, kx2, kx3 = jax.random.split(key, 5)

    B, C, H, W = 2, 4, 16, 16
    # DC offset exercises the centered (two-pass) variance path.
    x = jax.random.normal(kx, (B, C, H, W), dtype=jnp.float32) + 3.0
    gamma = jax.random.normal(kg, (C,), dtype=jnp.float32) * 0.1 + 1.0
    beta = jax.random.normal(kb, (C,), dtype=jnp.float32) * 0.1

    out = jax.block_until_ready(layer_norm_proxy(x, gamma, beta))
    ref = _reference(x, gamma, beta)
    assert out.shape == (B, C, H, W)
    assert jnp.allclose(out, ref, atol=1e-4, rtol=1e-4)

    # Fused GELU epilogue (conv_offset: LayerNormProxy -> nn.GELU).
    out_g = jax.block_until_ready(layer_norm_proxy(x, gamma, beta, fuse_gelu=True))
    ref_g = _reference(x, gamma, beta, fuse_gelu=True)
    assert jnp.allclose(out_g, ref_g, atol=1e-4, rtol=1e-4)

    # Ragged trailing spatial tile with an explicit batch-blocked (Bt=2) spec.
    H2, W2 = 16, 20  # H*W = 320 -> tiles of 128 with a ragged tail of 64
    x2 = jax.random.normal(kx2, (B, C, H2, W2), dtype=jnp.float32)
    out2 = jax.block_until_ready(layer_norm_proxy(x2, gamma, beta, block=(2, 128)))
    ref2 = _reference(x2, gamma, beta)
    assert out2.shape == (B, C, H2, W2)
    assert jnp.allclose(out2, ref2, atol=1e-4, rtol=1e-4)

    # bf16 input (production dtype): exercises padded-sublane / f32-upcast VMEM
    # accounting and a ragged batch block (B=3, Bt=2).
    x3 = jax.random.normal(kx3, (3, C, H, W), dtype=jnp.float32).astype(jnp.bfloat16)
    g16, b16 = gamma.astype(jnp.bfloat16), beta.astype(jnp.bfloat16)
    out3 = jax.block_until_ready(layer_norm_proxy(x3, g16, b16, block=(2, 256)))
    ref3 = _reference(x3, g16, b16)
    assert out3.dtype == jnp.bfloat16
    assert jnp.allclose(out3.astype(jnp.float32), ref3.astype(jnp.float32),
                        atol=5e-2, rtol=5e-2)

    print("KERNEL_OK")
</pallas_src>

<mosaic_0001>
module attributes {stable_mosaic.version = 11 : i64} {
  func.func @_layernorm_nchw_kernel(%arg0: i32, %arg1: i32, %arg2: memref<1x4x128xf32, #tpu.memory_space<vmem>>, %arg3: memref<1x4x1xf32, #tpu.memory_space<vmem>>, %arg4: memref<1x4x1xf32, #tpu.memory_space<vmem>>, %arg5: memref<1x4x128xf32, #tpu.memory_space<vmem>>) attributes {dimension_semantics = [#tpu.dimension_semantics<parallel>, #tpu.dimension_semantics<parallel>], iteration_bounds = array<i64: 2, 2>, scalar_prefetch = 0 : i64, scratch_operands = 0 : i64, tpu.core_type = #tpu.core_type<tc>, window_params = [{transform_indices = @transform_0, window_bounds = array<i64: 1, 4, 128>}, {pipeline_mode = #tpu.pipeline_mode<synchronous>, transform_indices = @transform_1, window_bounds = array<i64: 1, 4, 1>}, {pipeline_mode = #tpu.pipeline_mode<synchronous>, transform_indices = @transform_2, window_bounds = array<i64: 1, 4, 1>}, {transform_indices = @transform_3, window_bounds = array<i64: 1, 4, 128>}]} {
    %c0 = arith.constant 0 : index
    %c0_0 = arith.constant 0 : index
    %c0_1 = arith.constant 0 : index
    %0 = vector.load %arg2[%c0, %c0_0, %c0_1] : memref<1x4x128xf32, #tpu.memory_space<vmem>>, vector<1x4x128xf32>
    %cst = arith.constant dense<0.000000e+00> : vector<1x128xf32>
    %1 = vector.multi_reduction <add>, %0, %cst [1] : vector<1x4x128xf32> to vector<1x128xf32>
    %2 = vector.shape_cast %1 : vector<1x128xf32> to vector<1x1x128xf32>
    %cst_2 = arith.constant 2.500000e-01 : f32
    %3 = vector.broadcast %cst_2 : f32 to vector<1x1x128xf32>
    %4 = arith.mulf %2, %3 : vector<1x1x128xf32>
    %5 = vector.broadcast %4 : vector<1x1x128xf32> to vector<1x4x128xf32>
    %6 = arith.subf %0, %5 : vector<1x4x128xf32>
    %7 = arith.mulf %6, %6 : vector<1x4x128xf32>
    %cst_3 = arith.constant dense<0.000000e+00> : vector<1x128xf32>
    %8 = vector.multi_reduction <add>, %7, %cst_3 [1] : vector<1x4x128xf32> to vector<1x128xf32>
    %9 = vector.shape_cast %8 : vector<1x128xf32> to vector<1x1x128xf32>
    %cst_4 = arith.constant 2.500000e-01 : f32
    %10 = vector.broadcast %cst_4 : f32 to vector<1x1x128xf32>
    %11 = arith.mulf %9, %10 : vector<1x1x128xf32>
    %cst_5 = arith.constant 9.99999974E-6 : f32
    %12 = vector.broadcast %cst_5 : f32 to vector<1x1x128xf32>
    %13 = arith.addf %11, %12 : vector<1x1x128xf32>
    %14 = math.rsqrt %13 : vector<1x1x128xf32>
    %c0_6 = arith.constant 0 : index
    %c0_7 = arith.constant 0 : index
    %c0_8 = arith.constant 0 : index
    %15 = vector.load %arg3[%c0_6, %c0_7, %c0_8] : memref<1x4x1xf32, #tpu.memory_space<vmem>>, vector<1x4x1xf32>
    %c0_9 = arith.constant 0 : index
    %c0_10 = arith.constant 0 : index
    %c0_11 = arith.constant 0 : index
    %16 = vector.load %arg4[%c0_9, %c0_10, %c0_11] : memref<1x4x1xf32, #tpu.memory_space<vmem>>, vector<1x4x1xf32>
    %17 = vector.broadcast %14 : vector<1x1x128xf32> to vector<1x4x128xf32>
    %18 = arith.mulf %6, %17 : vector<1x4x128xf32>
    %19 = vector.broadcast %15 : vector<1x4x1xf32> to vector<1x4x128xf32>
    %20 = arith.mulf %18, %19 : vector<1x4x128xf32>
    %21 = vector.broadcast %16 : vector<1x4x1xf32> to vector<1x4x128xf32>
    %22 = arith.addf %20, %21 : vector<1x4x128xf32>
    %c0_12 = arith.constant 0 : index
    %c0_13 = arith.constant 0 : index
    %c0_14 = arith.constant 0 : index
    %23 = vector.load %arg5[%c0_12, %c0_13, %c0_14] : memref<1x4x128xf32, #tpu.memory_space<vmem>>, vector<1x4x128xf32>
    tpu.vector_store %arg5[%c0_12, %c0_13, %c0_14], %22 {strides = array<i32>} : memref<1x4x128xf32, #tpu.memory_space<vmem>>, vector<1x4x128xf32>,
    return
  }
  func.func @transform_0(%arg0: i32, %arg1: i32) -> (i32, i32, i32) {
    %c0_i32 = arith.constant 0 : i32
    %c0_i32_0 = arith.constant 0 : i32
    return %arg0, %c0_i32, %arg1 : i32, i32, i32
  }
  func.func @transform_1(%arg0: i32, %arg1: i32) -> (i32, i32, i32) {
    %c0_i32 = arith.constant 0 : i32
    %c0_i32_0 = arith.constant 0 : i32
    %c0_i32_1 = arith.constant 0 : i32
    %c0_i32_2 = arith.constant 0 : i32
    return %c0_i32, %c0_i32_0, %c0_i32_1 : i32, i32, i32
  }
  func.func @transform_2(%arg0: i32, %arg1: i32) -> (i32, i32, i32) {
    %c0_i32 = arith.constant 0 : i32
    %c0_i32_0 = arith.constant 0 : i32
    %c0_i32_1 = arith.constant 0 : i32
    %c0_i32_2 = arith.constant 0 : i32
    return %c0_i32, %c0_i32_0, %c0_i32_1 : i32, i32, i32
  }
  func.func @transform_3(%arg0: i32, %arg1: i32) -> (i32, i32, i32) {
    %c0_i32 = arith.constant 0 : i32
    %c0_i32_0 = arith.constant 0 : i32
    return %arg0, %c0_i32, %arg1 : i32, i32, i32
  }
}

</mosaic_0001>

<llo_original>
// kernel: tpu_custom_call.1
$region0: #{tpu_custom_call.1}
  #allocation0 [shape = 'u32[]', space=smem, size = 0x4, offset = 0x4, fixed_abs, tag = 'smem constant byte address 0x4 - core index']
  #allocation1 [shape = 'u32[72,128]{1,0:T(1,128)}', space=vmem, size = 0x9000, scoped, tag = 'internal scratch']
  %s0 = inlined_call_operand.hbm [shape: f32[2,4,256], index: 0, kind: input, shape index: {}]
  %s1 = inlined_call_operand.vmem [shape: f32[1,4,1], index: 1, kind: input, shape index: {}]
  %s2 = inlined_call_operand.vmem [shape: f32[1,4,1], index: 2, kind: input, shape index: {}]
  %s3 = inlined_call_operand.hbm [shape: f32[2,4,256], index: 3, kind: output, shape index: {}]
  %s4 = sld [smem:[#allocation0]]
  $region49: #{tpu_custom_call.1} parent=0
    _
  %s6 = ssub.s32 1, %s4
  %s7 = scalar_select 0, %s6, %s4
  $region1: #{tpu_custom_call.1} parent=0
    #allocation2 [shape = 'u8[4096]{0}', space=vmem, size = 0x1000, scoped, tag = 'input window, operand 0']
    #allocation3 [shape = 's32[2]{0}', space=sflag, size = 0x8, scoped, tag = 'scoped memory for tpu_custom_call.1']
    #allocation4 [shape = 's32[2]{0}', space=sflag, size = 0x8, scoped, tag = 'scoped memory for tpu_custom_call.1']
    #allocation5 [shape = 'u8[4096]{0}', space=vmem, size = 0x1000, scoped, tag = 'output window, operand 0']
    %8 = vsyncpa [#allocation3], 0
    %s9 = scalar_lea.sflag [#allocation3], 1
    %10 = vsyncpa %s9, 0
    %11 = vsyncpa [#allocation4], 0
    %s12 = scalar_lea.sflag [#allocation4], 1
    %13 = vsyncpa %s12, 0
    loop: start=0, step=1, limit=6
    $region2: #{tpu_custom_call.1} parent=1 // loop_pre_header
      _
    $region3: #{tpu_custom_call.1} parent=1 // loop_header
      %s15 = sphi 0, %s19
      %p16 = scmp.ge.s32.totalorder %s15, 6
      %s22 = sphi 0, %s34
      %s23 = sphi 0, %s30
      %s24 = sphi 0, %s22
      %s25 = sphi 0, %s23
      %s26 = sphi 0, %s24
      %s27 = sphi 0, %s25
      %s39 = sphi 0, %s41
      %s42 = sphi 0, %s39
      %s43 = sphi 0, %s42
      %s59 = sphi 0, %s43
      %s63 = sphi 0, %s63
      %s65 = sphi 0, %s63
      %s66 = sphi 0, %s65
      %s80 = sphi 0, %s66
      %s84 = sphi 0, %s84
      %s86 = sphi 0, %s84
      %s87 = sphi 0, %s86
      %s101 = sphi 0, %s87
      %s109 = sphi 0, %s111
      %s112 = sphi 0, %s109
      %s113 = sphi 0, %s112
      %s129 = sphi 0, %s113
    $region4: #{tpu_custom_call.1} parent=1 // loop_header_branch
      %18 = sbr.rel (%p16) target = $region8
    $region5: #{tpu_custom_call.1} parent=1 // loop_body
      %s20 = ssub.s32 %s15, 1
      %s21 = ssub.s32 %s15, 2
      %s28 = sadd.s32 1, %s23
      %p29 = scmp.ge.s32.totalorder %s28, 2
      %s30 = scalar_select %p29, 0, %s28
      %s31 = sadd.s32 1, %s22
      %s32 = scalar_select %p29, %s31, %s22
      %p33 = scmp.ge.s32.totalorder %s32, 2
      %s34 = scalar_select %p33, 0, %s32
      %s35 = ssub.s32 %s22, %s34
      %s36 = ssub.s32 %s23, %s30
      %s37 = sor.u32 %s35, %s36
      %p38 = scmp.eq.s32.totalorder %s37, 0
      %s40 = sadd.s32 %s39, 1
      %s41 = scalar_select %p38, %s39, %s40
      %p44 = pneg %p38
      %p45 = scmp.eq.s32.totalorder %s15, 3
      %p46 = por %p44, %p45
      %p47 = scmp.ne.s32.totalorder %s39, %s42
      %p48 = scmp.eq.s32.totalorder %s15, 0
      %p49 = por %p47, %p48
      %p50 = scmp.ne.s32.totalorder %s39, %s42
      %p51 = scmp.eq.s32.totalorder %s20, 3
      %p52 = por %p50, %p51
      %p53 = scmp.ne.s32.totalorder %s42, %s43
      %p54 = scmp.eq.s32.totalorder %s20, 0
      %p55 = por %p53, %p54
      %p56 = scmp.ne.s32.totalorder %s42, %s43
      %p57 = scmp.eq.s32.totalorder %s21, 3
      %p58 = por %p56, %p57
      %p60 = scmp.ne.s32.totalorder %s43, %s59
      %p61 = scmp.eq.s32.totalorder %s21, 0
      %p62 = por %p60, %p61
      %s64 = sadd.s32 %s63, 1
      %p67 = scmp.eq.s32.totalorder %s15, 3
      %p68 = scmp.ne.s32.totalorder %s63, %s65
      %p69 = scmp.eq.s32.totalorder %s15, 0
      %p70 = por %p68, %p69
      %p71 = scmp.ne.s32.totalorder %s63, %s65
      %p72 = scmp.eq.s32.totalorder %s20, 3
      %p73 = por %p71, %p72
      %p74 = scmp.ne.s32.totalorder %s65, %s66
      %p75 = scmp.eq.s32.totalorder %s20, 0
      %p76 = por %p74, %p75
      %p77 = scmp.ne.s32.totalorder %s65, %s66
      %p78 = scmp.eq.s32.totalorder %s21, 3
      %p79 = por %p77, %p78
      %p81 = scmp.ne.s32.totalorder %s66, %s80
      %p82 = scmp.eq.s32.totalorder %s21, 0
      %p83 = por %p81, %p82
      %s85 = sadd.s32 %s84, 1
      %p88 = scmp.eq.s32.totalorder %s15, 3
      %p89 = scmp.ne.s32.totalorder %s84, %s86
      %p90 = scmp.eq.s32.totalorder %s15, 0
      %p91 = por %p89, %p90
      %p92 = scmp.ne.s32.totalorder %s84, %s86
      %p93 = scmp.eq.s32.totalorder %s20, 3
      %p94 = por %p92, %p93
      %p95 = scmp.ne.s32.totalorder %s86, %s87
      %p96 = scmp.eq.s32.totalorder %s20, 0
      %p97 = por %p95, %p96
      %p98 = scmp.ne.s32.totalorder %s86, %s87
      %p99 = scmp.eq.s32.totalorder %s21, 3
      %p100 = por %p98, %p99
      %p102 = scmp.ne.s32.totalorder %s87, %s101
      %p103 = scmp.eq.s32.totalorder %s21, 0
      %p104 = por %p102, %p103
      %s105 = ssub.s32 %s22, %s34
      %s106 = ssub.s32 %s23, %s30
      %s107 = sor.u32 %s105, %s106
      %p108 = scmp.eq.s32.totalorder %s107, 0
      %s110 = sadd.s32 %s109, 1
      %s111 = scalar_select %p108, %s109, %s110
      %p114 = pneg %p108
      %p115 = scmp.eq.s32.totalorder %s15, 3
      %p116 = por %p114, %p115
      %p117 = scmp.ne.s32.totalorder %s109, %s112
      %p118 = scmp.eq.s32.totalorder %s15, 0
      %p119 = por %p117, %p118
      %p120 = scmp.ne.s32.totalorder %s109, %s112
      %p121 = scmp.eq.s32.totalorder %s20, 3
      %p122 = por %p120, %p121
      %p123 = scmp.ne.s32.totalorder %s112, %s113
      %p124 = scmp.eq.s32.totalorder %s20, 0
      %p125 = por %p123, %p124
      %p126 = scmp.ne.s32.totalorder %s112, %s113
      %p127 = scmp.eq.s32.totalorder %s21, 3
      %p128 = por %p126, %p127
      %p130 = scmp.ne.s32.totalorder %s113, %s129
      %p131 = scmp.eq.s32.totalorder %s21, 0
      %p132 = por %p130, %p131
      %p133 = scmp.le.s32.totalorder 1, %s15
      %p134 = scmp.lt.s32.totalorder %s15, 5
      %p135 = pnand %p133, %p134
      %p136 = pneg %p135
      // Predicated region
      $region9: #{tpu_custom_call.1} parent=5 // pred_check
        _
      $region10: #{tpu_custom_call.1} parent=5 // pred_check_branch
        %138 = sbr.rel (%p135) target = $region12
      $region11: #{tpu_custom_call.1} parent=5 // pred_region
        %s139 = ssub.s32 %s15, 1
        // Predicated region
        $region13: #{tpu_custom_call.1} parent=11 // pred_check
          %p140 = pneg %p76
        $region14: #{tpu_custom_call.1} parent=11 // pred_check_branch
          %142 = sbr.rel (%p140) target = $region16
        $region15: #{tpu_custom_call.1} parent=11 // pred_region
          _
        $region16: #{tpu_custom_call.1} parent=11 // pred_fallthru
          _
        // Predicated region
        $region17: #{tpu_custom_call.1} parent=11 // pred_check
          %p143 = pneg %p97
        $region18: #{tpu_custom_call.1} parent=11 // pred_check_branch
          %145 = sbr.rel (%p143) target = $region20
        $region19: #{tpu_custom_call.1} parent=11 // pred_region
          _
        $region20: #{tpu_custom_call.1} parent=11 // pred_fallthru
          _
      $region12: #{tpu_custom_call.1} parent=5 // pred_fallthru
        _
      %p146 = scmp.lt.s32.totalorder %s15, 4
      // Predicated region
      $region21: #{tpu_custom_call.1} parent=5 // pred_check
        %p147 = pneg %p146
      $region22: #{tpu_custom_call.1} parent=5 // pred_check_branch
        %149 = sbr.rel (%p147) target = $region24
      $region23: #{tpu_custom_call.1} parent=5 // pred_region
        // Predicated region
        $region25: #{tpu_custom_call.1} parent=23 // pred_check
          %p150 = pneg %p49
        $region26: #{tpu_custom_call.1} parent=23 // pred_check_branch
          %152 = sbr.rel (%p150) target = $region28
        $region27: #{tpu_custom_call.1} parent=23 // pred_region
          %s153 = sand.u32 %s39, 1
          %s154 = scalar_lea.sflag [#allocation3], %s153
          %s155 = sand.u32 %s39, 1
          %s156 = smul.addr %s155, 4
          %s157 = scalar_lea.vmem [#allocation2], %s156
          %159 = vsyncadd %s154, 0
          %s160 = smul.addr %s22, 2
          %s161 = sadd.s32 %s23, %s160
          %s162 = smul.addr %s161, 4
          %s163 = scalar_lea.hbm %s0, %s162
          %s165 = sshll.u32 %s163, 4
          %s166 = int_to_ptr.hbm [resolvable:$true] %s165
          %s167 = sshll.u32 %s157, 4
          %s168 = int_to_ptr.vmem [resolvable:$true] %s167
          %170 = dma.hbm_to_vmem [thread:$0]  %s166, 64, %s168, %s154
        $region28: #{tpu_custom_call.1} parent=23 // pred_fallthru
          _
      $region24: #{tpu_custom_call.1} parent=5 // pred_fallthru
        _
      %p171 = scmp.le.s32.totalorder 1, %s15
      %p172 = scmp.lt.s32.totalorder %s15, 5
      %p173 = pnand %p171, %p172
      %p174 = pneg %p173
      // Predicated region
      $region29: #{tpu_custom_call.1} parent=5 // pred_check
        _
      $region30: #{tpu_custom_call.1} parent=5 // pred_check_branch
        %176 = sbr.rel (%p173) target = $region32
      $region31: #{tpu_custom_call.1} parent=5 // pred_region
        %s177 = ssub.s32 %s15, 1
        %s178 = sand.u32 %s42, 1
        %s179 = scalar_lea.sflag [#allocation3], %s178
        %s180 = sand.u32 %s42, 1
        %s181 = smul.addr %s180, 4
        %s182 = scalar_lea.vmem [#allocation2], %s181
        // Predicated region
        $region33: #{tpu_custom_call.1} parent=31 // pred_check
          %p183 = pneg %p55
        $region34: #{tpu_custom_call.1} parent=31 // pred_check_branch
          %185 = sbr.rel (%p183) target = $region36
        $region35: #{tpu_custom_call.1} parent=31 // pred_region
          %187 = dma.done %s179, 64
        $region36: #{tpu_custom_call.1} parent=31 // pred_fallthru
          _
        %s188 = sand.u32 %s42, 1
        %s189 = scalar_lea.sflag [#allocation3], %s188
        %s190 = sand.u32 %s42, 1
        %s191 = smul.addr %s190, 4
        %s192 = scalar_lea.vmem [#allocation2], %s191
        %p193 = pneg %p55
        %p194 = pneg %p52
        %p195 = pneg %p76
        %p196 = pneg %p73
        %p197 = pneg %p97
        %p198 = pneg %p94
        %p199 = pneg %p125
        %p200 = pneg %p122
        %s201 = sand.u32 %s112, 1
        %s202 = scalar_lea.sflag [#allocation4], %s201
        %s203 = sand.u32 %s112, 1
        %s204 = smul.addr %s203, 4
        %s205 = scalar_lea.vmem [#allocation5], %s204
        %v206 = vld [vmem:[%s182] sm:$0xf]
        %vm207 = vcmask 1043456
        %v208 = vsel %vm207, %v206, 0.0
        %v209 = vrot.slane %v208, 4
        %v210 = vadd.f32 %v208, %v209
        %v211 = vrot.slane %v210, 2
        %v212 = vadd.f32 %v210, %v211
        %v213 = vrot.slane %v212, 1
        %v214 = vadd.f32 %v212, %v213
        %v215 = vmul.f32 %v214, 0.25
        %v216 = vsub.f32 %v206, %v215
        %v217 = vmul.f32 %v216, %v216
        %v218 = vsel %vm207, %v217, 0.0
        %v219 = vrot.slane %v218, 4
        %v220 = vadd.f32 %v218, %v219
        %v221 = vrot.slane %v220, 2
        %v222 = vadd.f32 %v220, %v221
        %v223 = vrot.slane %v222, 1
        %v224 = vadd.f32 %v222, %v223
        %v225 = vmul.f32 %v224, 0.25
        %v226 = vadd.f32 %v225, 1e-05
        %v227 = vrsqrt.pop %v226
        %v228 = vmul.f32 %v227, %v226
        %v229 = vmul.f32 %v228, %v227
        %v230 = vmul.f32 0.5, %v229
        %v231 = vsub.f32 1.5, %v230
        %v232 = vmul.f32 %v227, %v231
        %vm233 = vweird.f32 %v226
        %vm234 = vweird.f32 %v227
        %vm235 = vmor %vm233, %vm234
        %v236 = vsel %vm235, %v227, %v232
        %v237 = vld [vmem:[%s1] sm:$0xf]
        %v238 = vld [vmem:[%s2] sm:$0xf]
        %v239 = vmul.f32 %v216, %v236
        %241 = vset.pattern.permute.xlu0 0
        %242 = vperm.xlu0 %241, %v237
        %v243 = vpop.permute.xlu0 %242
        %v245 = vmul.f32 %v239, %v243
        %247 = vset.pattern.permute.xlu0 0
        %248 = vperm.xlu0 %247, %v238
        %v249 = vpop.permute.xlu0 %248
        %v251 = vadd.f32 %v245, %v249
        %252 = vst [vmem:[%s205] sm:$0xf] %v251
        %s253 = sand.u32 %s112, 1
        %s254 = scalar_lea.sflag [#allocation4], %s253
        %s255 = sand.u32 %s112, 1
        %s256 = smul.addr %s255, 4
        %s257 = scalar_lea.vmem [#allocation5], %s256
        // Predicated region
        $region37: #{tpu_custom_call.1} parent=31 // pred_check
          %p258 = pneg %p122
        $region38: #{tpu_custom_call.1} parent=31 // pred_check_branch
          %260 = sbr.rel (%p258) target = $region40
        $region39: #{tpu_custom_call.1} parent=31 // pred_region
          %262 = vsyncadd %s254, 0
          %s263 = smul.addr %s24, 2
          %s264 = sadd.s32 %s25, %s263
          %s265 = smul.addr %s264, 4
          %s266 = scalar_lea.hbm %s3, %s265
          %s268 = sshll.u32 %s257, 4
          %s269 = int_to_ptr.vmem [resolvable:$true] %s268
          %s270 = sshll.u32 %s266, 4
          %s271 = int_to_ptr.hbm [resolvable:$true] %s270
          %273 = dma.vmem_to_hbm [thread:$0]  %s269, 64, %s271, %s254
        $region40: #{tpu_custom_call.1} parent=31 // pred_fallthru
          _
      $region32: #{tpu_custom_call.1} parent=5 // pred_fallthru
        _
      %p274 = scmp.le.s32.totalorder 2, %s15
      // Predicated region
      $region41: #{tpu_custom_call.1} parent=5 // pred_check
        %p275 = pneg %p274
      $region42: #{tpu_custom_call.1} parent=5 // pred_check_branch
        %277 = sbr.rel (%p275) target = $region44
      $region43: #{tpu_custom_call.1} parent=5 // pred_region
        %s278 = ssub.s32 %s15, 2
        // Predicated region
        $region45: #{tpu_custom_call.1} parent=43 // pred_check
          %p279 = pneg %p128
        $region46: #{tpu_custom_call.1} parent=43 // pred_check_branch
          %281 = sbr.rel (%p279) target = $region48
        $region47: #{tpu_custom_call.1} parent=43 // pred_region
          %s282 = sand.u32 %s113, 1
          %s283 = scalar_lea.sflag [#allocation4], %s282
          %s284 = sand.u32 %s113, 1
          %s285 = smul.addr %s284, 4
          %s286 = scalar_lea.vmem [#allocation5], %s285
          %288 = dma.done %s283, 64
        $region48: #{tpu_custom_call.1} parent=43 // pred_fallthru
          _
      $region44: #{tpu_custom_call.1} parent=5 // pred_fallthru
        _
    $region6: #{tpu_custom_call.1} parent=1 // loop_footer
      %s19 = sadd.s32 1, %s15
    $region7: #{tpu_custom_call.1} parent=1 // loop_footer_branch
      %14 = sbr.rel target = $region3
    $region8: #{tpu_custom_call.1} parent=1 // loop_exit
      _
    %289 = vsyncpa [#allocation3], 1
    %s290 = scalar_lea.sflag [#allocation3], 1
    %291 = vsyncpa %s290, 1
    %292 = vsyncpa [#allocation4], 1
    %s293 = scalar_lea.sflag [#allocation4], 1
    %294 = vsyncpa %s293, 1

</llo_original>
